<compile_context>
chip_gen: v7x
topology: tpu7x:2x2x1
jax: 0.10.0
libtpu: 0.0.40
codegen_flags: <defaults>
</compile_context>

<pallas_src>
import functools

import jax
import jax.numpy as jnp
from jax.experimental import pallas as pl
from jax.experimental.pallas import tpu as pltpu

LANE = 128
TARGET_BLOCK_BYTES_F32 = 2 << 20      # per in/out VMEM buffer, f32-equivalent
MIN_SPLIT_ROWS = 512                  # only split into >=2 tiles above this size
VMEM_LIMIT_BYTES = 40 << 20           # < v7x 64 MiB physical; ample for 2 MiB blocks

GOLDEN_I32 = -1640531527              # 0x9E3779B9 as a wrapped int32
LB_C1 = 0x7FEB352D                    # lowbias32 finalizer constants
LB_C2 = 0x846CA68B

# Central-branch Giles (2010) erfinv coefficients (valid for w = -log(1-x^2) < 5).
_ERFINV_CENTRAL = (3.43273939e-07, -3.5233877e-06, -4.39150654e-06,
                   0.00021858087, -0.00125372503, -0.00417768164,
                   0.246640727, 1.50140941)
# Clamp |2u-1| so we stay in the central branch; caps |z| at ~2.9 sigma.
_X_CLAMP = 0.996


def _erfinv_central_f32(x):
    """Single-precision erfinv, central branch only (|x| <= ~0.9966)."""
    w = -jnp.log((1.0 - x) * (1.0 + x))   # log goes to the EUP slot (free when VALU-bound)
    wc = w - 2.5
    p = jnp.float32(2.81022636e-08)
    for c in _ERFINV_CENTRAL:
        p = p * wc + jnp.float32(c)
    return p * x


def _gaussian_noise_kernel(seed_ref, x_ref, o_ref, *, sigma, tile_rows):
    tr, lane = x_ref.shape                          # static block shape
    i = pl.program_id(0)
    row = jax.lax.broadcasted_iota(jnp.int32, (tr, lane), 0)
    col = jax.lax.broadcasted_iota(jnp.int32, (tr, lane), 1)
    # Global flat element index.  Wraps mod 2^32 for >=2^31-element tensors; the
    # stream stays deterministic and the noise quality is unaffected.
    idx = (i * tile_rows + row) * lane + col
    # lowbias32 counter hash, done in uint32 so the shifts are native logical
    # shifts (no extra mask-AND per shift on the VALU).
    h = pltpu.bitcast(idx * jnp.int32(GOLDEN_I32) + seed_ref[0], jnp.uint32)
    h = h ^ (h >> 16)
    h = h * jnp.uint32(LB_C1)
    h = h ^ (h >> 15)
    h = h * jnp.uint32(LB_C2)
    h = h ^ (h >> 16)
    bits24 = pltpu.bitcast(h >> 8, jnp.int32)       # uniform integer in [0, 2^24)
    u = (bits24.astype(jnp.float32) + 0.5) * jnp.float32(1.0 / (1 << 24))
    # Inverse-CDF transform, central branch only; |z| clamped at ~2.9 sigma.
    xu = jnp.clip(2.0 * u - 1.0, -_X_CLAMP, _X_CLAMP)
    z = jnp.float32(1.4142135623730951) * _erfinv_central_f32(xu)   # ~N(0, 1)
    x = x_ref[...].astype(jnp.float32)
    o_ref[...] = (x + z * (jnp.float32(sigma) * x)).astype(o_ref.dtype)


def _wrap_i32(v):
    v = int(v) & 0xFFFFFFFF
    return v - (1 << 32) if v >= (1 << 31) else v


def gaussian_noise(x, seed, *, sigma=0.1, training=True, is_relative_detach=True,
                   donate_input=False):
    """Pallas implementation of GaussianNoise.forward (forward values only)."""
    # TODO(synk): is_relative_detach / .detach() only change gradient flow; the
    # forward values are identical either way, so it is a no-op here.
    del is_relative_detach
    if (not training) or sigma == 0.0:
        return x

    orig_shape = x.shape
    itemsize = jnp.dtype(x.dtype).itemsize
    sublane = max(8, 32 // itemsize)        # 8 rows f32, 16 bf16, 32 int8/fp8
    n = x.size
    rows = pl.cdiv(n, LANE)
    rows_padded = pl.cdiv(rows, sublane) * sublane
    padded_n = rows_padded * LANE

    flat = x.reshape(-1)
    needs_pad = padded_n != n
    if needs_pad:
        # TODO(synk): pad + slice costs an extra HBM pass each way; a masked
        # in-kernel ragged tail would avoid it, but typical conv activations
        # (channels * spatial multiples of 1024 elements) are already aligned.
        flat = jnp.pad(flat, (0, padded_n - n))
    x2d = flat.reshape(rows_padded, LANE)

    # Tile sizing: cap by the f32 compute footprint (kernel intermediates are f32
    # regardless of the stored dtype); keep a multiple of the dtype's sublane count.
    max_tile_rows = max(sublane,
                        (TARGET_BLOCK_BYTES_F32 // (LANE * 4)) // sublane * sublane)
    tile_rows = min(max_tile_rows, rows_padded)
    # Keep >= 2 tiles when the array is big enough so the v7x megacore's second
    # TensorCore gets work (grid axis is marked "parallel").
    if (tile_rows == rows_padded and rows_padded >= 2 * MIN_SPLIT_ROWS
            and rows_padded % (2 * sublane) == 0):
        tile_rows = rows_padded // 2
    grid = (pl.cdiv(rows_padded, tile_rows),)

    seed_arr = jnp.asarray([_wrap_i32(seed)], dtype=jnp.int32)

    extra = {}
    if donate_input:
        # Tensor input is argument index 1 (index 0 is the scalar-prefetch seed).
        extra["input_output_aliases"] = {1: 0}

    # TODO(synk): if a v7x bundle dump shows exposed DMA after the compute cuts,
    # add pipeline_mode=pl.Buffered(3) to the in/out BlockSpecs (VMEM headroom allows).
    out2d = pl.pallas_call(
        functools.partial(_gaussian_noise_kernel, sigma=float(sigma),
                          tile_rows=tile_rows),
        out_shape=jax.ShapeDtypeStruct((rows_padded, LANE), x.dtype),
        grid_spec=pltpu.PrefetchScalarGridSpec(
            num_scalar_prefetch=1,
            grid=grid,
            in_specs=[pl.BlockSpec((tile_rows, LANE), lambda i, seed: (i, 0))],
            out_specs=pl.BlockSpec((tile_rows, LANE), lambda i, seed: (i, 0)),
        ),
        compiler_params=pltpu.CompilerParams(
            dimension_semantics=("parallel",),      # tiles independent -> megacore
            vmem_limit_bytes=VMEM_LIMIT_BYTES,
        ),
        **extra,
    )(seed_arr, x2d)

    out = out2d.reshape(-1)
    if needs_pad:
        out = out[:n]
    return out.reshape(orig_shape)


if __name__ == "__main__":
    key = jax.random.PRNGKey(0)
    # NCHW activation, consistent with the conv features this module wraps.
    x = jax.random.normal(key, (2, 4, 16, 16), dtype=jnp.float32)
    sigma = 0.1

    y = gaussian_noise(x, seed=123, sigma=sigma, training=True)
    y = jax.block_until_ready(y)
    assert y.shape == x.shape and y.dtype == x.dtype

    # Recover the standard-normal draws: (y - x) = z * sigma * x.
    denom = sigma * x
    z = jnp.where(jnp.abs(denom) > 0, (y - x) / denom, 0.0)
    z_mean = float(jnp.mean(z))
    z_std = float(jnp.std(z))
    z_max = float(jnp.max(jnp.abs(z)))
    assert abs(z_mean) < 0.2, f"noise mean off: {z_mean}"
    assert 0.85 < z_std < 1.15, f"noise std off: {z_std}"
    assert z_max < 3.5, f"noise magnitude implausible: {z_max}"   # clamp at ~2.9 sigma

    # Deterministic in seed; different seeds decorrelate.
    y2 = jax.block_until_ready(gaussian_noise(x, seed=123, sigma=sigma, training=True))
    assert bool(jnp.all(y == y2))
    y3 = jax.block_until_ready(gaussian_noise(x, seed=7, sigma=sigma, training=True))
    assert not bool(jnp.all(y == y3))

    # Eval mode: identity.
    y_eval = jax.block_until_ready(gaussian_noise(x, seed=123, sigma=sigma, training=False))
    assert bool(jnp.all(y_eval == x))

    print("KERNEL_OK")
</pallas_src>

<mosaic_0001>
module attributes {stable_mosaic.version = 11 : i64} {
  func.func @_gaussian_noise_kernel(%arg0: i32, %arg1: memref<1xi32, #tpu.memory_space<smem>>, %arg2: memref<16x128xf32, #tpu.memory_space<vmem>>, %arg3: memref<16x128xf32, #tpu.memory_space<vmem>>) attributes {dimension_semantics = [#tpu.dimension_semantics<parallel>], iteration_bounds = array<i64: 1>, scalar_prefetch = 1 : i64, scratch_operands = 0 : i64, tpu.core_type = #tpu.core_type<tc>, window_params = [{transform_indices = @transform_0, window_bounds = array<i64: 16, 128>}, {transform_indices = @transform_1, window_bounds = array<i64: 16, 128>}]} {
    %0 = tpu.iota {dimensions = array<i32: 0>} : vector<16x128xi32>
    %1 = tpu.iota {dimensions = array<i32: 1>} : vector<16x128xi32>
    %c16_i32 = arith.constant 16 : i32
    %2 = arith.muli %arg0, %c16_i32 : i32
    %3 = vector.broadcast %2 : i32 to vector<16x128xi32>
    %4 = arith.addi %3, %0 : vector<16x128xi32>
    %c128_i32 = arith.constant 128 : i32
    %5 = vector.broadcast %c128_i32 : i32 to vector<16x128xi32>
    %6 = arith.muli %4, %5 : vector<16x128xi32>
    %7 = arith.addi %6, %1 : vector<16x128xi32>
    %c-1640531527_i32 = arith.constant -1640531527 : i32
    %8 = vector.broadcast %c-1640531527_i32 : i32 to vector<16x128xi32>
    %9 = arith.muli %7, %8 : vector<16x128xi32>
    %c0 = arith.constant 0 : index
    %10 = memref.load %arg1[%c0] : memref<1xi32, #tpu.memory_space<smem>>
    %11 = vector.broadcast %10 : i32 to vector<16x128xi32>
    %12 = arith.addi %9, %11 : vector<16x128xi32>
    %13 = tpu.bitcast %12 : vector<16x128xi32> -> vector<16x128xi32>
    %c16_i32_0 = arith.constant 16 : i32
    %14 = vector.broadcast %c16_i32_0 : i32 to vector<16x128xi32>
    %15 = arith.shrui %13, %14 : vector<16x128xi32>
    %16 = arith.xori %13, %15 : vector<16x128xi32>
    %c2146121005_i32 = arith.constant 2146121005 : i32
    %17 = vector.broadcast %c2146121005_i32 : i32 to vector<16x128xi32>
    %18 = arith.muli %16, %17 : vector<16x128xi32>
    %c15_i32 = arith.constant 15 : i32
    %19 = vector.broadcast %c15_i32 : i32 to vector<16x128xi32>
    %20 = arith.shrui %18, %19 : vector<16x128xi32>
    %21 = arith.xori %18, %20 : vector<16x128xi32>
    %c-2073254261_i32 = arith.constant -2073254261 : i32
    %22 = vector.broadcast %c-2073254261_i32 : i32 to vector<16x128xi32>
    %23 = arith.muli %21, %22 : vector<16x128xi32>
    %c16_i32_1 = arith.constant 16 : i32
    %24 = vector.broadcast %c16_i32_1 : i32 to vector<16x128xi32>
    %25 = arith.shrui %23, %24 : vector<16x128xi32>
    %26 = arith.xori %23, %25 : vector<16x128xi32>
    %c8_i32 = arith.constant 8 : i32
    %27 = vector.broadcast %c8_i32 : i32 to vector<16x128xi32>
    %28 = arith.shrui %26, %27 : vector<16x128xi32>
    %29 = tpu.bitcast %28 : vector<16x128xi32> -> vector<16x128xi32>
    %30 = arith.sitofp %29 : vector<16x128xi32> to vector<16x128xf32>
    %cst = arith.constant 5.000000e-01 : f32
    %31 = vector.broadcast %cst : f32 to vector<16x128xf32>
    %32 = arith.addf %30, %31 : vector<16x128xf32>
    %cst_2 = arith.constant 5.96046448E-8 : f32
    %33 = vector.broadcast %cst_2 : f32 to vector<16x128xf32>
    %34 = arith.mulf %32, %33 : vector<16x128xf32>
    %cst_3 = arith.constant 2.000000e+00 : f32
    %35 = vector.broadcast %cst_3 : f32 to vector<16x128xf32>
    %36 = arith.mulf %35, %34 : vector<16x128xf32>
    %cst_4 = arith.constant 1.000000e+00 : f32
    %37 = vector.broadcast %cst_4 : f32 to vector<16x128xf32>
    %38 = arith.subf %36, %37 : vector<16x128xf32>
    %cst_5 = arith.constant -0.995999991 : f32
    %cst_6 = arith.constant 0.995999991 : f32
    %39 = vector.broadcast %cst_5 : f32 to vector<16x128xf32>
    %40 = arith.maximumf %39, %38 : vector<16x128xf32>
    %41 = vector.broadcast %cst_6 : f32 to vector<16x128xf32>
    %42 = arith.minimumf %41, %40 : vector<16x128xf32>
    %cst_7 = arith.constant 1.000000e+00 : f32
    %43 = vector.broadcast %cst_7 : f32 to vector<16x128xf32>
    %44 = arith.subf %43, %42 : vector<16x128xf32>
    %cst_8 = arith.constant 1.000000e+00 : f32
    %45 = vector.broadcast %cst_8 : f32 to vector<16x128xf32>
    %46 = arith.addf %45, %42 : vector<16x128xf32>
    %47 = arith.mulf %44, %46 : vector<16x128xf32>
    %48 = math.log %47 : vector<16x128xf32>
    %cst_9 = arith.constant 0.000000e+00 : f32
    %49 = vector.broadcast %cst_9 : f32 to vector<16x128xf32>
    %50 = arith.subf %49, %48 : vector<16x128xf32>
    %cst_10 = arith.constant 2.500000e+00 : f32
    %51 = vector.broadcast %cst_10 : f32 to vector<16x128xf32>
    %52 = arith.subf %50, %51 : vector<16x128xf32>
    %cst_11 = arith.constant 2.81022636E-8 : f32
    %53 = vector.broadcast %cst_11 : f32 to vector<16x128xf32>
    %54 = arith.mulf %53, %52 : vector<16x128xf32>
    %cst_12 = arith.constant 3.43273939E-7 : f32
    %55 = vector.broadcast %cst_12 : f32 to vector<16x128xf32>
    %56 = arith.addf %54, %55 : vector<16x128xf32>
    %57 = arith.mulf %56, %52 : vector<16x128xf32>
    %cst_13 = arith.constant -3.5233877E-6 : f32
    %58 = vector.broadcast %cst_13 : f32 to vector<16x128xf32>
    %59 = arith.addf %57, %58 : vector<16x128xf32>
    %60 = arith.mulf %59, %52 : vector<16x128xf32>
    %cst_14 = arith.constant -4.39150654E-6 : f32
    %61 = vector.broadcast %cst_14 : f32 to vector<16x128xf32>
    %62 = arith.addf %60, %61 : vector<16x128xf32>
    %63 = arith.mulf %62, %52 : vector<16x128xf32>
    %cst_15 = arith.constant 2.1858087E-4 : f32
    %64 = vector.broadcast %cst_15 : f32 to vector<16x128xf32>
    %65 = arith.addf %63, %64 : vector<16x128xf32>
    %66 = arith.mulf %65, %52 : vector<16x128xf32>
    %cst_16 = arith.constant -0.00125372503 : f32
    %67 = vector.broadcast %cst_16 : f32 to vector<16x128xf32>
    %68 = arith.addf %66, %67 : vector<16x128xf32>
    %69 = arith.mulf %68, %52 : vector<16x128xf32>
    %cst_17 = arith.constant -0.00417768164 : f32
    %70 = vector.broadcast %cst_17 : f32 to vector<16x128xf32>
    %71 = arith.addf %69, %70 : vector<16x128xf32>
    %72 = arith.mulf %71, %52 : vector<16x128xf32>
    %cst_18 = arith.constant 0.246640727 : f32
    %73 = vector.broadcast %cst_18 : f32 to vector<16x128xf32>
    %74 = arith.addf %72, %73 : vector<16x128xf32>
    %75 = arith.mulf %74, %52 : vector<16x128xf32>
    %cst_19 = arith.constant 1.50140941 : f32
    %76 = vector.broadcast %cst_19 : f32 to vector<16x128xf32>
    %77 = arith.addf %75, %76 : vector<16x128xf32>
    %78 = arith.mulf %77, %42 : vector<16x128xf32>
    %cst_20 = arith.constant 1.41421354 : f32
    %79 = vector.broadcast %cst_20 : f32 to vector<16x128xf32>
    %80 = arith.mulf %79, %78 : vector<16x128xf32>
    %c0_21 = arith.constant 0 : index
    %c0_22 = arith.constant 0 : index
    %81 = vector.load %arg2[%c0_21, %c0_22] : memref<16x128xf32, #tpu.memory_space<vmem>>, vector<16x128xf32>
    %cst_23 = arith.constant 1.000000e-01 : f32
    %82 = vector.broadcast %cst_23 : f32 to vector<16x128xf32>
    %83 = arith.mulf %82, %81 : vector<16x128xf32>
    %84 = arith.mulf %80, %83 : vector<16x128xf32>
    %85 = arith.addf %81, %84 : vector<16x128xf32>
    %c0_24 = arith.constant 0 : index
    %c0_25 = arith.constant 0 : index
    %86 = vector.load %arg3[%c0_24, %c0_25] : memref<16x128xf32, #tpu.memory_space<vmem>>, vector<16x128xf32>
    tpu.vector_store %arg3[%c0_24, %c0_25], %85 {strides = array<i32>} : memref<16x128xf32, #tpu.memory_space<vmem>>, vector<16x128xf32>,
    return
  }
  func.func @transform_0(%arg0: i32, %arg1: memref<1xi32, #tpu.memory_space<smem>>) -> (i32, i32) {
    %c0_i32 = arith.constant 0 : i32
    %c0_i32_0 = arith.constant 0 : i32
    return %arg0, %c0_i32 : i32, i32
  }
  func.func @transform_1(%arg0: i32, %arg1: memref<1xi32, #tpu.memory_space<smem>>) -> (i32, i32) {
    %c0_i32 = arith.constant 0 : i32
    %c0_i32_0 = arith.constant 0 : i32
    return %arg0, %c0_i32 : i32, i32
  }
}

</mosaic_0001>

<llo_original>
// kernel: tpu_custom_call.1
$region0: #{tpu_custom_call.1}
  #allocation0 [shape = 'u32[]', space=smem, size = 0x4, offset = 0x4, fixed_abs, tag = 'smem constant byte address 0x4 - core index']
  #allocation1 [shape = 'u32[144,128]{1,0:T(1,128)}', space=vmem, size = 0x12000, scoped, tag = 'internal scratch']
  #allocation2 [shape = 's32[1]{0}', space=sflag, size = 0x4, scoped, tag = 'scoped memory for tpu_custom_call.1']
  #allocation3 [shape = 's32[1]{0:T(128)S(6)}', space=smem, size = 0x200, scoped, tag = 'prefetched SMEM operand 0']
  %s0 = inlined_call_operand.<no memory space> [shape: s32[1], index: 0, kind: input, shape index: {}]
  %s1 = inlined_call_operand.hbm [shape: f32[16,128], index: 1, kind: input, shape index: {}]
  %s2 = inlined_call_operand.hbm [shape: f32[16,128], index: 2, kind: output, shape index: {}]
  %s3 = sld [smem:[#allocation0]]
  $region18: #{tpu_custom_call.1} parent=0
    _
  %s5 = ssub.s32 1, %s3
  %s6 = scalar_select 0, %s5, %s3
  %7 = sst [smem:[#allocation3]] %s0
  $region1: #{tpu_custom_call.1} parent=0
    #allocation4 [shape = 'u8[8192]{0}', space=vmem, size = 0x2000, scoped, tag = 'input window, operand 1, single buffered']
    #allocation5 [shape = 's32[1]{0}', space=sflag, size = 0x4, scoped, tag = 'scoped memory for tpu_custom_call.1']
    #allocation6 [shape = 's32[1]{0}', space=sflag, size = 0x4, scoped, tag = 'scoped memory for tpu_custom_call.1']
    #allocation7 [shape = 'u8[8192]{0}', space=vmem, size = 0x2000, scoped, tag = 'output window, operand 0, single buffered']
    %8 = vsyncpa [#allocation5], 0
    %9 = vsyncpa [#allocation6], 0
    // Predicated region
    $region2: #{tpu_custom_call.1} parent=1 // pred_check
      _
    $region3: #{tpu_custom_call.1} parent=1 // pred_check_branch
      %11 = sbr.rel (0) target = $region5
    $region4: #{tpu_custom_call.1} parent=1 // pred_region
      %s13 = ssub.s32 256, 256
      %14 = vsyncadd [#allocation5], %s13
      %s15 = sshll.u32 [#allocation4], 4
      %s16 = int_to_ptr.vmem [resolvable:$true] %s15
      %21 = dma.hbm_to_vmem [thread:$0]  %s1, 256, %s16, [#allocation5], 128, 128, 8
    $region5: #{tpu_custom_call.1} parent=1 // pred_fallthru
      _
    // Predicated region
    $region6: #{tpu_custom_call.1} parent=1 // pred_check
      _
    $region7: #{tpu_custom_call.1} parent=1 // pred_check_branch
      %23 = sbr.rel (0) target = $region9
    $region8: #{tpu_custom_call.1} parent=1 // pred_region
      %24 = dma.done [#allocation5], 256
    $region9: #{tpu_custom_call.1} parent=1 // pred_fallthru
      _
    %v25 = vlaneseq
    %v26 = vshrl.u32 %v25, 7
    %v27 = vadd.s32 %v26, 8
    %v28 = vlaneseq
    %v29 = vand.u32 %v28, 127
    %s30 = smul.u32 0, 16
    %v31 = vstv %s30
    %v32 = vadd.s32 %v31, %v26
    %v33 = vadd.s32 %v31, %v27
    %v34 = vmul.u32 %v32, 128
    %v35 = vmul.u32 %v33, 128
    %v36 = vadd.s32 %v34, %v29
    %v37 = vadd.s32 %v35, %v29
    %v38 = vmul.u32 %v36, 2654435769
    %v39 = vmul.u32 %v37, 2654435769
    %s40 = sld [smem:[#allocation3]]
    %v41 = vstv %s40
    %v42 = vadd.s32 %v38, %v41
    %v43 = vadd.s32 %v39, %v41
    %v44 = vshrl.u32 %v42, 16
    %v45 = vshrl.u32 %v43, 16
    %v46 = vxor.u32 %v42, %v44
    %v47 = vxor.u32 %v43, %v45
    %v48 = vmul.u32 %v46, 2146121005
    %v49 = vmul.u32 %v47, 2146121005
    %v50 = vshrl.u32 %v48, 15
    %v51 = vshrl.u32 %v49, 15
    %v52 = vxor.u32 %v48, %v50
    %v53 = vxor.u32 %v49, %v51
    %v54 = vmul.u32 %v52, 2221713035
    %v55 = vmul.u32 %v53, 2221713035
    %v56 = vshrl.u32 %v54, 16
    %v57 = vshrl.u32 %v55, 16
    %v58 = vxor.u32 %v54, %v56
    %v59 = vxor.u32 %v55, %v57
    %v60 = vshrl.u32 %v58, 8
    %v61 = vshrl.u32 %v59, 8
    %v62 = vcvt.s32.f32 %v60
    %v63 = vcvt.s32.f32 %v61
    %v64 = vadd.f32 %v62, 0.5
    %v65 = vadd.f32 %v63, 0.5
    %v66 = vmul.f32 %v64, 5.9604645e-08
    %v67 = vmul.f32 %v65, 5.9604645e-08
    %v68 = vmul.f32 %v66, 2.0
    %v69 = vmul.f32 %v67, 2.0
    %v70 = vsub.f32 %v68, 1.0
    %v71 = vsub.f32 %v69, 1.0
    %v72 = vmax.f32 %v70, -0.996
    %v73 = vmax.f32 %v71, -0.996
    %v74 = vmin.f32 %v72, 0.996
    %v75 = vmin.f32 %v73, 0.996
    %v76 = vsub.f32 1.0, %v74
    %v77 = vsub.f32 1.0, %v75
    %v78 = vadd.f32 %v74, 1.0
    %v79 = vadd.f32 %v75, 1.0
    %v80 = vmul.f32 %v76, %v78
    %v81 = vmul.f32 %v77, %v79
    %v82 = vlog2.pop %v80
    %v83 = vmul.f32 %v82, 0.6931472
    %v84 = vlog2.pop %v81
    %v85 = vmul.f32 %v84, 0.6931472
    %v86 = vsub.f32 0.0, %v83
    %v87 = vsub.f32 0.0, %v85
    %v88 = vsub.f32 %v86, 2.5
    %v89 = vsub.f32 %v87, 2.5
    %v90 = vmul.f32 %v88, 2.8102264e-08
    %v91 = vmul.f32 %v89, 2.8102264e-08
    %v92 = vadd.f32 %v90, 3.4327394e-07
    %v93 = vadd.f32 %v91, 3.4327394e-07
    %v94 = vmul.f32 %v92, %v88
    %v95 = vmul.f32 %v93, %v89
    %v96 = vadd.f32 %v94, -3.5233877e-06
    %v97 = vadd.f32 %v95, -3.5233877e-06
    %v98 = vmul.f32 %v96, %v88
    %v99 = vmul.f32 %v97, %v89
    %v100 = vadd.f32 %v98, -4.3915065e-06
    %v101 = vadd.f32 %v99, -4.3915065e-06
    %v102 = vmul.f32 %v100, %v88
    %v103 = vmul.f32 %v101, %v89
    %v104 = vadd.f32 %v102, 0.00021858087
    %v105 = vadd.f32 %v103, 0.00021858087
    %v106 = vmul.f32 %v104, %v88
    %v107 = vmul.f32 %v105, %v89
    %v108 = vadd.f32 %v106, -0.001253725
    %v109 = vadd.f32 %v107, -0.001253725
    %v110 = vmul.f32 %v108, %v88
    %v111 = vmul.f32 %v109, %v89
    %v112 = vadd.f32 %v110, -0.0041776816
    %v113 = vadd.f32 %v111, -0.0041776816
    %v114 = vmul.f32 %v112, %v88
    %v115 = vmul.f32 %v113, %v89
    %v116 = vadd.f32 %v114, 0.24664073
    %v117 = vadd.f32 %v115, 0.24664073
    %v118 = vmul.f32 %v116, %v88
    %v119 = vmul.f32 %v117, %v89
    %v120 = vadd.f32 %v118, 1.5014094
    %v121 = vadd.f32 %v119, 1.5014094
    %v122 = vmul.f32 %v120, %v74
    %v123 = vmul.f32 %v121, %v75
    %v124 = vmul.f32 %v122, 1.4142135
    %v125 = vmul.f32 %v123, 1.4142135
    %v126 = vld [vmem:[#allocation4] sm:$0xff]
    %v127 = vld [vmem:[#allocation4 + $0x8] sm:$0xff]
    %v128 = vmul.f32 %v126, 0.1
    %v129 = vmul.f32 %v127, 0.1
    %v130 = vmul.f32 %v124, %v128
    %v131 = vmul.f32 %v125, %v129
    %v132 = vadd.f32 %v126, %v130
    %v133 = vadd.f32 %v127, %v131
    %134 = vst [vmem:[#allocation7] sm:$0xff] %v132
    %135 = vst [vmem:[#allocation7 + $0x8] sm:$0xff] %v133
    // Predicated region
    $region10: #{tpu_custom_call.1} parent=1 // pred_check
      _
    $region11: #{tpu_custom_call.1} parent=1 // pred_check_branch
      %137 = sbr.rel (0) target = $region13
    $region12: #{tpu_custom_call.1} parent=1 // pred_region
      %s139 = ssub.s32 256, 256
      %140 = vsyncadd [#allocation6], %s139
      %s141 = sshll.u32 [#allocation7], 4
      %s142 = int_to_ptr.vmem [resolvable:$true] %s141
      %147 = dma.vmem_to_hbm [thread:$0]  %s142, 256, %s2, [#allocation6], 128, 128, 8
    $region13: #{tpu_custom_call.1} parent=1 // pred_fallthru
      _
    // Predicated region
    $region14: #{tpu_custom_call.1} parent=1 // pred_check
      _
    $region15: #{tpu_custom_call.1} parent=1 // pred_check_branch
      %149 = sbr.rel (0) target = $region17
    $region16: #{tpu_custom_call.1} parent=1 // pred_region
      %150 = dma.done [#allocation6], 256
    $region17: #{tpu_custom_call.1} parent=1 // pred_fallthru
      _
    %151 = vsyncpa [#allocation5], 1
    %152 = vsyncpa [#allocation6], 1

</llo_original>
